<compile_context>
chip_gen: v5e
topology: v5e:2x2
jax: 0.10.0
libtpu: 0.0.40
codegen_flags: <defaults>
</compile_context>

<pallas_src>
import jax
import jax.numpy as jnp
from jax.experimental import pallas as pl
from jax.experimental.pallas import tpu as pltpu


def _round_up(x, m):
    return ((x + m - 1) // m) * m


def _ffn_ln_kernel(x_ref, w1_ref, w2_ref, g_ref, b_ref, o_ref, acc_ref):
    # x_ref:  (tile_m, d_model)   input dtype (e.g. f32)
    # w1_ref: (d_model, ff_tile)  bf16
    # w2_ref: (ff_tile, d_model)  bf16
    # g_ref:  (1, d_model) f32    LayerNorm weight
    # b_ref:  (1, d_model) f32    LayerNorm bias
    # o_ref:  (tile_m, d_model)
    # acc_ref:(tile_m, d_model)   f32 VMEM accumulator (persists across k)
    k = pl.program_id(1)
    nk = pl.num_programs(1)

    @pl.when(k == 0)
    def _():
        acc_ref[...] = jnp.zeros_like(acc_ref)

    # bf16 MXU path, f32 accumulation.
    x_bf = x_ref[...].astype(jnp.bfloat16)
    h = jnp.dot(x_bf, w1_ref[...], preferred_element_type=jnp.float32)
    h = jnp.maximum(h, 0.0).astype(jnp.bfloat16)
    acc_ref[...] += jnp.dot(h, w2_ref[...], preferred_element_type=jnp.float32)

    @pl.when(k == nk - 1)
    def _():
        # residual + LayerNorm epilogue in f32 (torch default eps=1e-5,
        # biased variance).
        y = acc_ref[...] + x_ref[...].astype(jnp.float32)
        mean = jnp.mean(y, axis=-1, keepdims=True)
        diff = y - mean
        var = jnp.mean(diff * diff, axis=-1, keepdims=True)
        y_norm = diff * jax.lax.rsqrt(var + 1e-5)
        o_ref[...] = (y_norm * g_ref[...] + b_ref[...]).astype(o_ref.dtype)


def poswise_feedforward(x, w1, w2, ln_gamma, ln_beta, *, tile_m=256, ff_tile=512):
    """x: [B, S, d_model]; w1: [d_model, d_ff]; w2: [d_ff, d_model]."""
    B, S, d_model = x.shape
    d_ff = w1.shape[1]
    N = B * S

    # --- row tiling: 8-aligned tiles, pad rows so the grid divides evenly ---
    tile_m = int(min(tile_m, _round_up(N, 8)))
    tile_m = _round_up(tile_m, 8)
    n_pad = _round_up(N, tile_m)

    # --- d_ff chunking: chunks 128-aligned (or the full d_ff if small) -------
    if d_ff <= ff_tile:
        ff_tile = d_ff
        dff_pad = d_ff
    else:
        ff_tile = _round_up(min(ff_tile, d_ff), 128)
        dff_pad = _round_up(d_ff, ff_tile)

    x2d = x.reshape(N, d_model)
    if n_pad != N:
        x2d = jnp.pad(x2d, ((0, n_pad - N), (0, 0)))

    # Weights streamed in bf16 (halves VMEM footprint, 2-4x MXU throughput).
    w1b = w1.astype(jnp.bfloat16)
    w2b = w2.astype(jnp.bfloat16)
    if dff_pad != d_ff:
        # zero-padded d_ff columns/rows contribute nothing after ReLU/matmul.
        w1b = jnp.pad(w1b, ((0, 0), (0, dff_pad - d_ff)))
        w2b = jnp.pad(w2b, ((0, dff_pad - d_ff), (0, 0)))

    g2d = ln_gamma.reshape(1, d_model).astype(jnp.float32)
    b2d = ln_beta.reshape(1, d_model).astype(jnp.float32)

    grid = (n_pad // tile_m, dff_pad // ff_tile)

    # --- VMEM budget (double-buffered tiles + accumulator + hidden) ----------
    xb = x2d.dtype.itemsize
    vmem_need = (
        2 * tile_m * d_model * xb       # x tile (double-buffered)
        + 2 * d_model * ff_tile * 2     # w1 slice (bf16)
        + 2 * ff_tile * d_model * 2     # w2 slice (bf16)
        + 2 * tile_m * d_model * xb     # out tile
        + tile_m * d_model * 4          # f32 accumulator scratch
        + tile_m * ff_tile * 4          # hidden intermediate
        + 4 * d_model * 4               # gamma / beta
    )
    vmem_limit = int(min(max(2 * vmem_need + (1 << 20), 32 << 20), 48 << 20))

    cost = pl.CostEstimate(
        flops=4 * N * d_model * d_ff,
        transcendentals=N,
        bytes_accessed=(x2d.size * xb + w1b.size * 2 + w2b.size * 2
                        + n_pad * d_model * xb + 2 * d_model * 4),
    )

    out2d = pl.pallas_call(
        _ffn_ln_kernel,
        out_shape=jax.ShapeDtypeStruct((n_pad, d_model), x.dtype),
        grid_spec=pltpu.PrefetchScalarGridSpec(
            num_scalar_prefetch=0,
            grid=grid,
            in_specs=[
                pl.BlockSpec((tile_m, d_model), lambda i, k: (i, 0)),   # x rows
                pl.BlockSpec((d_model, ff_tile), lambda i, k: (0, k)),  # W1 slice
                pl.BlockSpec((ff_tile, d_model), lambda i, k: (k, 0)),  # W2 slice
                pl.BlockSpec((1, d_model), lambda i, k: (0, 0)),        # LN gamma
                pl.BlockSpec((1, d_model), lambda i, k: (0, 0)),        # LN beta
            ],
            out_specs=pl.BlockSpec((tile_m, d_model), lambda i, k: (i, 0)),
            scratch_shapes=[pltpu.VMEM((tile_m, d_model), jnp.float32)],
        ),
        compiler_params=pltpu.CompilerParams(
            dimension_semantics=("parallel", "arbitrary"),
            vmem_limit_bytes=vmem_limit,
        ),
        cost_estimate=cost,
    )(x2d, w1b, w2b, g2d, b2d)

    return out2d[:N].reshape(B, S, d_model)


def reference(x, w1, w2, ln_gamma, ln_beta):
    h = jnp.maximum(x @ w1, 0.0)
    y = h @ w2 + x
    mean = jnp.mean(y, axis=-1, keepdims=True)
    var = jnp.mean((y - mean) ** 2, axis=-1, keepdims=True)
    return (y - mean) / jnp.sqrt(var + 1e-5) * ln_gamma + ln_beta


if __name__ == "__main__":
    key = jax.random.PRNGKey(0)

    # ---- Test 1: shapes matching the module's toy configuration ------------
    batch, seq, d_model, d_ff = 2, 8, 32, 64
    kx, kw1, kw2, kx2, kw3, kw4 = jax.random.split(key, 6)

    x = jax.random.normal(kx, (batch, seq, d_model), dtype=jnp.float32)
    # torch Linear weight is (out, in); we store the transposed (in, out) form.
    w1 = jax.random.normal(kw1, (d_model, d_ff), dtype=jnp.float32) * 0.05
    w2 = jax.random.normal(kw2, (d_ff, d_model), dtype=jnp.float32) * 0.05
    ln_gamma = jnp.ones((d_model,), dtype=jnp.float32)   # nn.LayerNorm defaults
    ln_beta = jnp.zeros((d_model,), dtype=jnp.float32)

    out = poswise_feedforward(x, w1, w2, ln_gamma, ln_beta)
    out = jax.block_until_ready(out)
    ref = reference(x, w1, w2, ln_gamma, ln_beta)
    assert out.shape == (batch, seq, d_model)
    # bf16 matmul inputs (f32 accumulation) -> slightly looser tolerance.
    assert jnp.allclose(out, ref, atol=2e-2, rtol=2e-2), "mismatch vs reference (test 1)"

    # ---- Test 2: non-divisible rows + d_ff chunking (2 x 128 chunks) --------
    b2, s2, dm2, dff2 = 2, 7, 32, 256   # N=14 -> row padding path
    x2 = jax.random.normal(kx2, (b2, s2, dm2), dtype=jnp.float32)
    w1_2 = jax.random.normal(kw3, (dm2, dff2), dtype=jnp.float32) * 0.05
    w2_2 = jax.random.normal(kw4, (dff2, dm2), dtype=jnp.float32) * 0.05
    g2 = jnp.ones((dm2,), dtype=jnp.float32)
    be2 = jnp.zeros((dm2,), dtype=jnp.float32)

    out2 = poswise_feedforward(x2, w1_2, w2_2, g2, be2, tile_m=8, ff_tile=128)
    out2 = jax.block_until_ready(out2)
    ref2 = reference(x2, w1_2, w2_2, g2, be2)
    assert out2.shape == (b2, s2, dm2)
    assert jnp.allclose(out2, ref2, atol=2e-2, rtol=2e-2), "mismatch vs reference (test 2)"

    print("KERNEL_OK")
</pallas_src>

<mosaic_0001>
module attributes {stable_mosaic.version = 11 : i64} {
  func.func @_ffn_ln_kernel(%arg0: i32, %arg1: i32, %arg2: memref<16x32xf32, #tpu.memory_space<vmem>>, %arg3: memref<32x64xbf16, #tpu.memory_space<vmem>>, %arg4: memref<64x32xbf16, #tpu.memory_space<vmem>>, %arg5: memref<1x32xf32, #tpu.memory_space<vmem>>, %arg6: memref<1x32xf32, #tpu.memory_space<vmem>>, %arg7: memref<16x32xf32, #tpu.memory_space<vmem>>, %arg8: memref<16x32xf32, #tpu.memory_space<vmem>>) attributes {dimension_semantics = [#tpu.dimension_semantics<parallel>, #tpu.dimension_semantics<arbitrary>], iteration_bounds = array<i64: 1, 1>, scalar_prefetch = 0 : i64, scratch_operands = 1 : i64, tpu.core_type = #tpu.core_type<tc>, window_params = [{transform_indices = @transform_0, window_bounds = array<i64: 16, 32>}, {transform_indices = @transform_1, window_bounds = array<i64: 32, 64>}, {transform_indices = @transform_2, window_bounds = array<i64: 64, 32>}, {pipeline_mode = #tpu.pipeline_mode<synchronous>, transform_indices = @transform_3, window_bounds = array<i64: 1, 32>}, {pipeline_mode = #tpu.pipeline_mode<synchronous>, transform_indices = @transform_4, window_bounds = array<i64: 1, 32>}, {transform_indices = @transform_5, window_bounds = array<i64: 16, 32>}]} {
    %c0_i32 = arith.constant 0 : i32
    %0 = arith.cmpi eq, %arg1, %c0_i32 : i32
    %1 = arith.extui %0 : i1 to i32
    %c0_i32_0 = arith.constant 0 : i32
    %2 = arith.cmpi ne, %1, %c0_i32_0 : i32
    scf.if %2 {
      %cst_14 = arith.constant 0.000000e+00 : f32
      %18 = vector.broadcast %cst_14 : f32 to vector<16x32xf32>
      %c0_15 = arith.constant 0 : index
      %c0_16 = arith.constant 0 : index
      %19 = vector.load %arg8[%c0_15, %c0_16] : memref<16x32xf32, #tpu.memory_space<vmem>>, vector<16x32xf32>
      tpu.vector_store %arg8[%c0_15, %c0_16], %18 {strides = array<i32>} : memref<16x32xf32, #tpu.memory_space<vmem>>, vector<16x32xf32>,
    } else {
    }
    %c0 = arith.constant 0 : index
    %c0_1 = arith.constant 0 : index
    %3 = vector.load %arg2[%c0, %c0_1] : memref<16x32xf32, #tpu.memory_space<vmem>>, vector<16x32xf32>
    %4 = arith.truncf %3 : vector<16x32xf32> to vector<16x32xbf16>
    %c0_2 = arith.constant 0 : index
    %c0_3 = arith.constant 0 : index
    %5 = vector.load %arg3[%c0_2, %c0_3] : memref<32x64xbf16, #tpu.memory_space<vmem>>, vector<32x64xbf16>
    %cst = arith.constant dense<0.000000e+00> : vector<16x64xf32>
    %6 = tpu.matmul %4, %5, %cst {dimension_numbers = #tpu.dot_dimension_numbers<[1], [0], [0], [1], [0, 0, 1, 1], [], []>} : vector<16x32xbf16>, vector<32x64xbf16>, vector<16x64xf32> -> vector<16x64xf32>
    %cst_4 = arith.constant 0.000000e+00 : f32
    %7 = vector.broadcast %cst_4 : f32 to vector<16x64xf32>
    %8 = arith.maximumf %6, %7 : vector<16x64xf32>
    %9 = arith.truncf %8 : vector<16x64xf32> to vector<16x64xbf16>
    %c0_5 = arith.constant 0 : index
    %c0_6 = arith.constant 0 : index
    %10 = vector.load %arg8[%c0_5, %c0_6] : memref<16x32xf32, #tpu.memory_space<vmem>>, vector<16x32xf32>
    %c0_7 = arith.constant 0 : index
    %c0_8 = arith.constant 0 : index
    %11 = vector.load %arg4[%c0_7, %c0_8] : memref<64x32xbf16, #tpu.memory_space<vmem>>, vector<64x32xbf16>
    %cst_9 = arith.constant dense<0.000000e+00> : vector<16x32xf32>
    %12 = tpu.matmul %9, %11, %cst_9 {dimension_numbers = #tpu.dot_dimension_numbers<[1], [0], [0], [1], [0, 0, 1, 1], [], []>} : vector<16x64xbf16>, vector<64x32xbf16>, vector<16x32xf32> -> vector<16x32xf32>
    %13 = arith.addf %10, %12 : vector<16x32xf32>
    %c0_10 = arith.constant 0 : index
    %c0_11 = arith.constant 0 : index
    %14 = vector.load %arg8[%c0_10, %c0_11] : memref<16x32xf32, #tpu.memory_space<vmem>>, vector<16x32xf32>
    tpu.vector_store %arg8[%c0_10, %c0_11], %13 {strides = array<i32>} : memref<16x32xf32, #tpu.memory_space<vmem>>, vector<16x32xf32>,
    %c0_i32_12 = arith.constant 0 : i32
    %15 = arith.cmpi eq, %arg1, %c0_i32_12 : i32
    %16 = arith.extui %15 : i1 to i32
    %c0_i32_13 = arith.constant 0 : i32
    %17 = arith.cmpi ne, %16, %c0_i32_13 : i32
    scf.if %17 {
      %c0_14 = arith.constant 0 : index
      %c0_15 = arith.constant 0 : index
      %18 = vector.load %arg8[%c0_14, %c0_15] : memref<16x32xf32, #tpu.memory_space<vmem>>, vector<16x32xf32>
      %c0_16 = arith.constant 0 : index
      %c0_17 = arith.constant 0 : index
      %19 = vector.load %arg2[%c0_16, %c0_17] : memref<16x32xf32, #tpu.memory_space<vmem>>, vector<16x32xf32>
      %20 = arith.addf %18, %19 : vector<16x32xf32>
      %cst_18 = arith.constant dense<0.000000e+00> : vector<16xf32>
      %21 = vector.multi_reduction <add>, %20, %cst_18 [1] : vector<16x32xf32> to vector<16xf32>
      %22 = vector.shape_cast %21 : vector<16xf32> to vector<16x1xf32>
      %cst_19 = arith.constant 3.200000e+01 : f32
      %23 = vector.broadcast %cst_19 : f32 to vector<16x1xf32>
      %24 = arith.divf %22, %23 : vector<16x1xf32>
      %25 = vector.broadcast %24 : vector<16x1xf32> to vector<16x32xf32>
      %26 = arith.subf %20, %25 : vector<16x32xf32>
      %27 = arith.mulf %26, %26 : vector<16x32xf32>
      %cst_20 = arith.constant dense<0.000000e+00> : vector<16xf32>
      %28 = vector.multi_reduction <add>, %27, %cst_20 [1] : vector<16x32xf32> to vector<16xf32>
      %29 = vector.shape_cast %28 : vector<16xf32> to vector<16x1xf32>
      %cst_21 = arith.constant 3.200000e+01 : f32
      %30 = vector.broadcast %cst_21 : f32 to vector<16x1xf32>
      %31 = arith.divf %29, %30 : vector<16x1xf32>
      %cst_22 = arith.constant 9.99999974E-6 : f32
      %32 = vector.broadcast %cst_22 : f32 to vector<16x1xf32>
      %33 = arith.addf %31, %32 : vector<16x1xf32>
      %34 = math.rsqrt %33 : vector<16x1xf32>
      %35 = vector.broadcast %34 : vector<16x1xf32> to vector<16x32xf32>
      %36 = arith.mulf %26, %35 : vector<16x32xf32>
      %c0_23 = arith.constant 0 : index
      %c0_24 = arith.constant 0 : index
      %37 = vector.load %arg5[%c0_23, %c0_24] : memref<1x32xf32, #tpu.memory_space<vmem>>, vector<1x32xf32>
      %38 = vector.broadcast %37 : vector<1x32xf32> to vector<16x32xf32>
      %39 = arith.mulf %36, %38 : vector<16x32xf32>
      %c0_25 = arith.constant 0 : index
      %c0_26 = arith.constant 0 : index
      %40 = vector.load %arg6[%c0_25, %c0_26] : memref<1x32xf32, #tpu.memory_space<vmem>>, vector<1x32xf32>
      %41 = vector.broadcast %40 : vector<1x32xf32> to vector<16x32xf32>
      %42 = arith.addf %39, %41 : vector<16x32xf32>
      %c0_27 = arith.constant 0 : index
      %c0_28 = arith.constant 0 : index
      %43 = vector.load %arg7[%c0_27, %c0_28] : memref<16x32xf32, #tpu.memory_space<vmem>>, vector<16x32xf32>
      tpu.vector_store %arg7[%c0_27, %c0_28], %42 {strides = array<i32>} : memref<16x32xf32, #tpu.memory_space<vmem>>, vector<16x32xf32>,
    } else {
    }
    return
  }
  func.func @transform_0(%arg0: i32, %arg1: i32) -> (i32, i32) {
    %c0_i32 = arith.constant 0 : i32
    %c0_i32_0 = arith.constant 0 : i32
    return %arg0, %c0_i32 : i32, i32
  }
  func.func @transform_1(%arg0: i32, %arg1: i32) -> (i32, i32) {
    %c0_i32 = arith.constant 0 : i32
    %c0_i32_0 = arith.constant 0 : i32
    return %c0_i32, %arg1 : i32, i32
  }
  func.func @transform_2(%arg0: i32, %arg1: i32) -> (i32, i32) {
    %c0_i32 = arith.constant 0 : i32
    %c0_i32_0 = arith.constant 0 : i32
    return %arg1, %c0_i32 : i32, i32
  }
  func.func @transform_3(%arg0: i32, %arg1: i32) -> (i32, i32) {
    %c0_i32 = arith.constant 0 : i32
    %c0_i32_0 = arith.constant 0 : i32
    %c0_i32_1 = arith.constant 0 : i32
    return %c0_i32, %c0_i32_0 : i32, i32
  }
  func.func @transform_4(%arg0: i32, %arg1: i32) -> (i32, i32) {
    %c0_i32 = arith.constant 0 : i32
    %c0_i32_0 = arith.constant 0 : i32
    %c0_i32_1 = arith.constant 0 : i32
    return %c0_i32, %c0_i32_0 : i32, i32
  }
  func.func @transform_5(%arg0: i32, %arg1: i32) -> (i32, i32) {
    %c0_i32 = arith.constant 0 : i32
    %c0_i32_0 = arith.constant 0 : i32
    return %arg0, %c0_i32 : i32, i32
  }
}

</mosaic_0001>

<llo_original>
// kernel: tpu_custom_call.1
$region0: #{tpu_custom_call.1}
  #allocation0 [shape = 'u32[]', space=smem, size = 0x4, offset = 0x4, fixed_abs, tag = 'smem constant byte address 0x4 - core index']
  #allocation1 [shape = 'u32[72,128]{1,0:T(1,128)}', space=vmem, size = 0x9000, scoped, tag = 'internal scratch']
  #allocation2 [shape = 'f32[16,32]{1,0:T(8,128)}', space=vmem, size = 0x2000, scoped, tag = 'scratch operand']
  %s0 = inlined_call_operand.vmem [shape: f32[16,32], index: 0, kind: input, shape index: {}]
  %s1 = inlined_call_operand.vmem [shape: bf16[32,64], index: 1, kind: input, shape index: {}]
  %s2 = inlined_call_operand.vmem [shape: bf16[64,32], index: 2, kind: input, shape index: {}]
  %s3 = inlined_call_operand.vmem [shape: f32[1,32], index: 3, kind: input, shape index: {}]
  %s4 = inlined_call_operand.vmem [shape: f32[1,32], index: 4, kind: input, shape index: {}]
  %s5 = inlined_call_operand.hbm [shape: f32[16,32], index: 5, kind: output, shape index: {}]
  %s6 = sld [smem:[#allocation0]]
  $region38: #{tpu_custom_call.1} parent=0
    _
  %s8 = ssub.s32 1, %s6
  %s9 = scalar_select 0, %s8, %s6
  $region1: #{tpu_custom_call.1} parent=0
    #allocation3 [shape = 'u8[8192]{0}', space=vmem, size = 0x2000, scoped, tag = 'output window, operand 0, single buffered']
    #allocation4 [shape = 's32[1]{0}', space=sflag, size = 0x4, scoped, tag = 'scoped memory for tpu_custom_call.1']
    %10 = vsyncpa [#allocation4], 0
    // Predicated region
    $region2: #{tpu_custom_call.1} parent=1 // pred_check
      _
    $region3: #{tpu_custom_call.1} parent=1 // pred_check_branch
      %12 = sbr.rel (0) target = $region5
    $region4: #{tpu_custom_call.1} parent=1 // pred_region
      _
    $region5: #{tpu_custom_call.1} parent=1 // pred_fallthru
      _
    // Predicated region
    $region6: #{tpu_custom_call.1} parent=1 // pred_check
      _
    $region7: #{tpu_custom_call.1} parent=1 // pred_check_branch
      %14 = sbr.rel (0) target = $region9
    $region8: #{tpu_custom_call.1} parent=1 // pred_region
      _
    $region9: #{tpu_custom_call.1} parent=1 // pred_fallthru
      _
    // Predicated region
    $region10: #{tpu_custom_call.1} parent=1 // pred_check
      _
    $region11: #{tpu_custom_call.1} parent=1 // pred_check_branch
      %16 = sbr.rel (0) target = $region13
    $region12: #{tpu_custom_call.1} parent=1 // pred_region
      _
    $region13: #{tpu_custom_call.1} parent=1 // pred_fallthru
      _
    // Predicated region
    $region14: #{tpu_custom_call.1} parent=1 // pred_check
      _
    $region15: #{tpu_custom_call.1} parent=1 // pred_check_branch
      %18 = sbr.rel (0) target = $region17
    $region16: #{tpu_custom_call.1} parent=1 // pred_region
      _
    $region17: #{tpu_custom_call.1} parent=1 // pred_fallthru
      _
    // Predicated region
    $region18: #{tpu_custom_call.1} parent=1 // pred_check
      _
    $region19: #{tpu_custom_call.1} parent=1 // pred_check_branch
      %20 = sbr.rel (0) target = $region21
    $region20: #{tpu_custom_call.1} parent=1 // pred_region
      _
    $region21: #{tpu_custom_call.1} parent=1 // pred_fallthru
      _
    %p22 = scmp.eq.s32.totalorder 0, 0
    // Predicated region
    $region22: #{tpu_custom_call.1} parent=1 // pred_check
      %p23 = pneg %p22
    $region23: #{tpu_custom_call.1} parent=1 // pred_check_branch
      %25 = sbr.rel (%p23) target = $region25
    $region24: #{tpu_custom_call.1} parent=1 // pred_region
      %vm26 = vcmask 261120
      %27 = vst.msk [vmem:[#allocation2] sm:$0xff] %vm26, 0.0
      %28 = vst.msk [vmem:[#allocation2 + $0x8] sm:$0xff] %vm26, 0.0
    $region25: #{tpu_custom_call.1} parent=1 // pred_fallthru
      _
    %v29 = vld [vmem:[%s0] sm:$0xff]
    %v30 = vld [vmem:[%s0 + $0x8] sm:$0xff]
    %v31 = vpack.c.bf16 %v30, %v29
    %v32 = vld [vmem:[%s1] sm:$0xf]
    %v33 = vld [vmem:[%s1 + $0x4] sm:$0xf]
    %v34 = vld [vmem:[%s1 + $0x8] sm:$0xf]
    %v35 = vld [vmem:[%s1 + $0xc] sm:$0xf]
    %v40 = vunpack.c.l.b16 %v32
    %v41 = vunpack.c.l.b16 %v33
    %v42 = vunpack.c.l.b16 %v34
    %v43 = vunpack.c.l.b16 %v35
    %v44 = vpack.c.b16 %v41, %v40
    %v45 = vpack.c.b16 %v43, %v42
    %vm48 = vcmask 261120
    %v50 = vsel %vm48, %v31, 0
    %52 = vmatpush.bf16.msra.mxu0 0
    %53 = vmatpush.bf16.msra.mxu0 0
    %54 = vmatpush.bf16.msra.mxu0 0
    %55 = vmatpush.bf16.msra.mxu0 0
    %56 = vmatpush.bf16.msra.mxu0 0
    %57 = vmatpush.bf16.msra.mxu0 0
    %58 = vmatpush.bf16.msra.mxu0 %v45
    %59 = vmatpush.bf16.msra.mxu0 %v44
    %60 = vmatmul.bf16.gmra.mxu0 %v50
    %v61 = vpop.f32.mrf.mxu0
    %v62 = vadd.f32 0.0, %v61
    %v63 = vpop.f32.mrf.mxu0
    %v64 = vadd.f32 0.0, %v63
    %65 = vdwg.mxu0
    %v66 = vmax.f32 %v62, 0.0
    %v67 = vmax.f32 %v64, 0.0
    %v68 = vpack.c.bf16 %v67, %v66
    %v69 = vld [vmem:[#allocation2] sm:$0xff]
    %v70 = vld [vmem:[#allocation2 + $0x8] sm:$0xff]
    %v71 = vld [vmem:[%s2] sm:$0xf]
    %v72 = vld [vmem:[%s2 + $0x4] sm:$0xf]
    %v73 = vld [vmem:[%s2 + $0x8] sm:$0xf]
    %v74 = vld [vmem:[%s2 + $0xc] sm:$0xf]
    %v75 = vld [vmem:[%s2 + $0x10] sm:$0xf]
    %v76 = vld [vmem:[%s2 + $0x14] sm:$0xf]
    %v77 = vld [vmem:[%s2 + $0x18] sm:$0xf]
    %v78 = vld [vmem:[%s2 + $0x1c] sm:$0xf]
    %v87 = vunpack.c.l.b16 %v71
    %v88 = vunpack.c.l.b16 %v72
    %v89 = vunpack.c.l.b16 %v73
    %v90 = vunpack.c.l.b16 %v74
    %v91 = vunpack.c.l.b16 %v75
    %v92 = vunpack.c.l.b16 %v76
    %v93 = vunpack.c.l.b16 %v77
    %v94 = vunpack.c.l.b16 %v78
    %v95 = vpack.c.b16 %v88, %v87
    %v96 = vpack.c.b16 %v90, %v89
    %v97 = vpack.c.b16 %v92, %v91
    %v98 = vpack.c.b16 %v94, %v93
    %vm103 = vcmask 523264
    %v105 = vsel %vm103, %v68, 0
    %107 = vmatpush.bf16.msra.mxu0 0
    %108 = vmatpush.bf16.msra.mxu0 0
    %109 = vmatpush.bf16.msra.mxu0 0
    %110 = vmatpush.bf16.msra.mxu0 0
    %111 = vmatpush.bf16.msra.mxu0 %v98
    %112 = vmatpush.bf16.msra.mxu0 %v97
    %113 = vmatpush.bf16.msra.mxu0 %v96
    %114 = vmatpush.bf16.msra.mxu0 %v95
    %115 = vmatmul.bf16.gmra.mxu0 %v105
    %v116 = vpop.f32.mrf.mxu0
    %v117 = vadd.f32 0.0, %v116
    %v118 = vpop.f32.mrf.mxu0
    %v119 = vadd.f32 0.0, %v118
    %120 = vdwg.mxu0
    %v121 = vadd.f32 %v69, %v117
    %v122 = vadd.f32 %v70, %v119
    %123 = vst.msk [vmem:[#allocation2] sm:$0xff] %vm48, %v121
    %124 = vst.msk [vmem:[#allocation2 + $0x8] sm:$0xff] %vm48, %v122
    // Predicated region
    $region26: #{tpu_custom_call.1} parent=1 // pred_check
      %p125 = pneg %p22
    $region27: #{tpu_custom_call.1} parent=1 // pred_check_branch
      %127 = sbr.rel (%p125) target = $region29
    $region28: #{tpu_custom_call.1} parent=1 // pred_region
      %v128 = vld [vmem:[#allocation2] sm:$0xff]
      %v129 = vld [vmem:[#allocation2 + $0x8] sm:$0xff]
      %v130 = vld [vmem:[%s0] sm:$0xff]
      %v131 = vld [vmem:[%s0 + $0x8] sm:$0xff]
      %v132 = vadd.f32 %v128, %v130
      %v133 = vadd.f32 %v129, %v131
      %v134 = vsel %vm48, %v132, 0.0
      %135 = vadd.xlane.f32.xlu0 %v134
      %v136 = vpop.xlane.xlu0 %135
      %v137 = vsel %vm48, %v133, 0.0
      %138 = vadd.xlane.f32.xlu0 %v137
      %v139 = vpop.xlane.xlu0 %138
      %v140 = vrcp.pop 32.0
      %v141 = vmul.f32 32.0, %v140
      %v142 = vsub.f32 1.0, %v141
      %v143 = vmul.f32 %v140, %v142
      %v144 = vadd.f32 %v140, %v143
      %vm145 = vweird.f32 %v140
      %v146 = vsel %vm145, %v140, %v144
      %v147 = vmul.f32 %v136, %v146
      %v148 = vmul.f32 %v139, %v146
      %v149 = vsub.f32 %v132, %v147
      %v150 = vsub.f32 %v133, %v148
      %v151 = vmul.f32 %v149, %v149
      %v152 = vmul.f32 %v150, %v150
      %v153 = vsel %vm48, %v151, 0.0
      %154 = vadd.xlane.f32.xlu0 %v153
      %v155 = vpop.xlane.xlu0 %154
      %v156 = vsel %vm48, %v152, 0.0
      %157 = vadd.xlane.f32.xlu0 %v156
      %v158 = vpop.xlane.xlu0 %157
      %v159 = vmul.f32 %v155, %v146
      %v160 = vmul.f32 %v158, %v146
      %v161 = vadd.f32 %v159, 1e-05
      %v162 = vadd.f32 %v160, 1e-05
      %v163 = vrsqrt.pop %v161
      %v164 = vmul.f32 %v163, %v161
      %v165 = vmul.f32 %v164, %v163
      %v166 = vmul.f32 0.5, %v165
      %v167 = vsub.f32 1.5, %v166
      %v168 = vmul.f32 %v163, %v167
      %vm169 = vweird.f32 %v161
      %vm170 = vweird.f32 %v163
      %vm171 = vmor %vm169, %vm170
      %v172 = vsel %vm171, %v163, %v168
      %v173 = vrsqrt.pop %v162
      %v174 = vmul.f32 %v173, %v162
      %v175 = vmul.f32 %v174, %v173
      %v176 = vmul.f32 0.5, %v175
      %v177 = vsub.f32 1.5, %v176
      %v178 = vmul.f32 %v173, %v177
      %vm179 = vweird.f32 %v162
      %vm180 = vweird.f32 %v173
      %vm181 = vmor %vm179, %vm180
      %v182 = vsel %vm181, %v173, %v178
      %v183 = vmul.f32 %v149, %v172
      %v184 = vmul.f32 %v150, %v182
      %v185 = vld [vmem:[%s3] sm:$0x1]
      %v187 = vperm.slane %v185, 0
      %v189 = vmul.f32 %v183, %v187
      %v190 = vmul.f32 %v184, %v187
      %v191 = vld [vmem:[%s4] sm:$0x1]
      %v193 = vperm.slane %v191, 0
      %v195 = vadd.f32 %v189, %v193
      %v196 = vadd.f32 %v190, %v193
      %197 = vst.msk [vmem:[#allocation3] sm:$0xff] %vm48, %v195
      %198 = vst.msk [vmem:[#allocation3 + $0x8] sm:$0xff] %vm48, %v196
    $region29: #{tpu_custom_call.1} parent=1 // pred_fallthru
      _
    // Predicated region
    $region30: #{tpu_custom_call.1} parent=1 // pred_check
      _
    $region31: #{tpu_custom_call.1} parent=1 // pred_check_branch
      %200 = sbr.rel (0) target = $region33
    $region32: #{tpu_custom_call.1} parent=1 // pred_region
      %202 = vsyncadd [#allocation4], 0
      %s203 = sshll.u32 [#allocation3], 4
      %s204 = int_to_ptr.vmem [resolvable:$true] %s203
      %s205 = sshll.u32 %s5, 4
      %s206 = int_to_ptr.hbm [resolvable:$true] %s205
      %211 = dma.vmem_to_hbm [thread:$0]  %s204, 256, %s206, [#allocation4], 128, 128, 8
    $region33: #{tpu_custom_call.1} parent=1 // pred_fallthru
      _
    // Predicated region
    $region34: #{tpu_custom_call.1} parent=1 // pred_check
      _
    $region35: #{tpu_custom_call.1} parent=1 // pred_check_branch
      %213 = sbr.rel (0) target = $region37
    $region36: #{tpu_custom_call.1} parent=1 // pred_region
      %215 = dma.done [#allocation4], 256
    $region37: #{tpu_custom_call.1} parent=1 // pred_fallthru
      _
    %216 = vsyncpa [#allocation4], 1

</llo_original>
